<compile_context>
chip_gen: v7x
topology: tpu7x:2x2x1
jax: 0.10.0
libtpu: 0.0.40
codegen_flags: <defaults>
</compile_context>

<pallas_src>
import functools

import jax
import jax.numpy as jnp
from jax import lax
from jax.experimental import pallas as pl
from jax.experimental.pallas import tpu as pltpu

EPS = 1e-5
LANE = 128
TS_MAX = 1024                       # rows of 128 lanes per block (1.5 MiB/ch)
SMALL_VMEM_BYTES = 12 * 1024 * 1024  # budget for the fully-fused resident path
VMEM_LIMIT = 32 * 1024 * 1024        # safe on v5e / v6e / v7x


def _round_up(a, m):
    return -(-a // m) * m


def _load_x(x_ref, cin, n_idx=0):
    """Load the Cin dense (TS, 128) slabs of one block as float32."""
    return [x_ref[n_idx, ci].astype(jnp.float32) for ci in range(cin)]


def _conv_all(xs, w_ref):
    """Bias-free 1x1 conv: Cout lists of (TS, 128) f32 (scalar weights, VPU FMAs)."""
    cout, cin = w_ref.shape
    ys = []
    for co in range(cout):
        y = xs[0] * w_ref[co, 0]
        for ci in range(1, cin):
            y = y + xs[ci] * w_ref[co, ci]
        ys.append(y)
    return ys


# ---------------- streaming path: pass 1 (bias-free moments) ----------------
def _stats_kernel(x_ref, w_ref, s1_ref, s2_ref, acc1, acc2):
    j = pl.program_id(2)

    @pl.when(j == 0)
    def _init():
        acc1[...] = jnp.zeros_like(acc1)
        acc2[...] = jnp.zeros_like(acc2)

    xs = _load_x(x_ref, w_ref.shape[1])
    ys = _conv_all(xs, w_ref)
    for co, y in enumerate(ys):          # pure dense VPU adds each step
        acc1[co] += y
        acc2[co] += y * y

    @pl.when(j == pl.num_programs(2) - 1)
    def _fin():                           # one cross-sublane reduce per sweep
        for co in range(acc1.shape[0]):
            s1_ref[0, 0, co:co + 1, :] = jnp.sum(acc1[co], axis=0, keepdims=True)
            s2_ref[0, 0, co:co + 1, :] = jnp.sum(acc2[co], axis=0, keepdims=True)


# ---------------- streaming path: pass 2 (conv with folded BN affine) -------
def _conv_affine_kernel(x_ref, w_ref, b_ref, o_ref):
    xs = _load_x(x_ref, w_ref.shape[1])
    ys = _conv_all(xs, w_ref)
    for co, y in enumerate(ys):
        o_ref[0, co] = (y + b_ref[co]).astype(o_ref.dtype)


# ---------------- small path: everything resident in VMEM, one call ---------
def _fused_small_kernel(x_ref, w_ref, b_ref, gamma_ref, beta_ref, invm_ref,
                        o_ref, y_scr):
    n, cin, _, _ = x_ref.shape
    cout = w_ref.shape[0]
    inv_m = invm_ref[0]
    for co in range(cout):
        s1 = jnp.zeros((1, 1), jnp.float32)
        s2 = jnp.zeros((1, 1), jnp.float32)
        for ni in range(n):
            y0 = x_ref[ni, 0].astype(jnp.float32) * w_ref[co, 0]
            for ci in range(1, cin):
                y0 = y0 + x_ref[ni, ci].astype(jnp.float32) * w_ref[co, ci]
            y_scr[ni, co] = y0
            s1 = s1 + jnp.sum(jnp.sum(y0, axis=1, keepdims=True),
                              axis=0, keepdims=True)
            s2 = s2 + jnp.sum(jnp.sum(y0 * y0, axis=1, keepdims=True),
                              axis=0, keepdims=True)
        mean0 = s1 * inv_m                              # mean of conv w/o bias
        var = jnp.maximum(s2 * inv_m - mean0 * mean0, 0.0)
        scale = gamma_ref[co] * lax.rsqrt(var + EPS)
        shift = beta_ref[co] - mean0 * scale            # conv bias cancels
        for ni in range(n):
            o_ref[ni, co] = (y_scr[ni, co] * scale + shift).astype(o_ref.dtype)


@functools.partial(jax.jit, static_argnames=("force_big",))
def conv1x1_bn(x_nchw, w, b, gamma, beta, force_big=False):
    """y = BatchNorm2d(Conv2d(Cin, Cout, 1)(x)) with batch statistics.

    x_nchw: (N, Cin, H, W); w: (Cout, Cin); b/gamma/beta: (Cout,).
    """
    # TODO(synk): BatchNorm2d running_mean/running_var/num_batches_tracked
    # buffer updates are a training side effect and are not materialized.
    n, cin, h, wd = x_nchw.shape
    cout = w.shape[0]
    hw = h * wd
    m_total = n * hw
    r0 = pl.cdiv(hw, LANE)

    smem = pl.BlockSpec(memory_space=pltpu.MemorySpace.SMEM)
    footprint = (cin + 2 * cout) * n * r0 * LANE * 4    # x + out + f32 scratch

    # ---------------- small inputs: single fused, VMEM-resident call --------
    if (not force_big) and n <= 8 and footprint <= SMALL_VMEM_BYTES:
        rp = r0
        hwp = rp * LANE
        x3 = x_nchw.reshape(n, cin, hw)
        if hwp != hw:
            x3 = jnp.pad(x3, ((0, 0), (0, 0), (0, hwp - hw)))
        x4 = x3.reshape(n, cin, rp, LANE)
        inv_m = jnp.full((1,), 1.0 / m_total, jnp.float32)
        vmem = pl.BlockSpec(memory_space=pltpu.MemorySpace.VMEM)
        y4 = pl.pallas_call(
            _fused_small_kernel,
            out_shape=jax.ShapeDtypeStruct((n, cout, rp, LANE), x_nchw.dtype),
            in_specs=[vmem, smem, smem, smem, smem, smem],
            out_specs=vmem,
            scratch_shapes=[pltpu.VMEM((n, cout, rp, LANE), jnp.float32)],
            compiler_params=pltpu.CompilerParams(vmem_limit_bytes=VMEM_LIMIT),
        )(x4, w, b, gamma, beta, inv_m)
        y3 = y4.reshape(n, cout, hwp)[:, :, :hw]
        return y3.reshape(n, cout, h, wd)

    # ---------------- large inputs: two streaming passes ---------------------
    if r0 <= TS_MAX:
        ts, splits = r0, 1
        rp, tiles = r0, 1
    else:
        ts, splits = TS_MAX, 2                 # split axis keeps 2 TCs busy
        rp = _round_up(r0, splits * ts)
        tiles = rp // (splits * ts)
    hwp = rp * LANE

    x3 = x_nchw.reshape(n, cin, hw)
    if hwp != hw:
        x3 = jnp.pad(x3, ((0, 0), (0, 0), (0, hwp - hw)))
    x4 = x3.reshape(n, cin, rp, LANE)

    grid = (n, splits, tiles)
    x_spec = pl.BlockSpec((1, cin, ts, LANE),
                          lambda i, s, j: (i, 0, s * tiles + j, 0))

    # pass 1: streaming bias-free sum / sum^2 (padding contributes exactly 0)
    stat_spec = pl.BlockSpec((1, 1, cout, LANE), lambda i, s, j: (i, s, 0, 0))
    s1, s2 = pl.pallas_call(
        _stats_kernel,
        out_shape=(jax.ShapeDtypeStruct((n, splits, cout, LANE), jnp.float32),
                   jax.ShapeDtypeStruct((n, splits, cout, LANE), jnp.float32)),
        grid=grid,
        in_specs=[x_spec, smem],
        out_specs=(stat_spec, stat_spec),
        scratch_shapes=[pltpu.VMEM((cout, ts, LANE), jnp.float32),
                        pltpu.VMEM((cout, ts, LANE), jnp.float32)],
        compiler_params=pltpu.CompilerParams(
            dimension_semantics=("parallel", "parallel", "arbitrary"),
            vmem_limit_bytes=VMEM_LIMIT),
    )(x4, w)

    # fold BN (batch mean, biased variance) into a per-channel affine
    sum1 = jnp.sum(s1, axis=(0, 1, 3))
    sum2 = jnp.sum(s2, axis=(0, 1, 3))
    mean0 = sum1 / m_total                      # mean of conv-without-bias
    var = jnp.maximum(sum2 / m_total - mean0 * mean0, 0.0)
    scale = gamma * jax.lax.rsqrt(var + EPS)
    w_fused = w * scale[:, None]
    b_fused = beta - mean0 * scale              # conv bias cancels exactly

    # pass 2: fused conv + affine, lane-dense NCHW-ordered stores
    o_spec = pl.BlockSpec((1, cout, ts, LANE),
                          lambda i, s, j: (i, 0, s * tiles + j, 0))
    y4 = pl.pallas_call(
        _conv_affine_kernel,
        out_shape=jax.ShapeDtypeStruct((n, cout, rp, LANE), x_nchw.dtype),
        grid=grid,
        in_specs=[x_spec, smem, smem],
        out_specs=o_spec,
        compiler_params=pltpu.CompilerParams(
            dimension_semantics=("parallel", "parallel", "parallel"),
            vmem_limit_bytes=VMEM_LIMIT),
    )(x4, w_fused, b_fused)

    y3 = y4.reshape(n, cout, hwp)[:, :, :hw]
    return y3.reshape(n, cout, h, wd)


if __name__ == "__main__":
    key = jax.random.PRNGKey(0)
    kw, kb, kx1, kx2, kx3 = jax.random.split(key, 5)

    C = 3
    conv_w = 0.1 * jax.random.normal(kw, (C, C), dtype=jnp.float32)
    conv_b = 0.1 * jax.random.normal(kb, (C,), dtype=jnp.float32)
    bn_gamma = jnp.ones((C,), dtype=jnp.float32)
    bn_beta = jnp.zeros((C,), dtype=jnp.float32)

    def reference(x):
        y = jnp.einsum("oc,nchw->nohw", conv_w, x) + conv_b[None, :, None, None]
        mu = jnp.mean(y, axis=(0, 2, 3), keepdims=True)
        var = jnp.mean((y - mu) ** 2, axis=(0, 2, 3), keepdims=True)
        return (bn_gamma[None, :, None, None] * (y - mu)
                * jax.lax.rsqrt(var + EPS) + bn_beta[None, :, None, None])

    cases = [
        ((2, C, 16, 16), kx1, False),   # fused small path, lane-aligned HW
        ((1, C, 3, 3),   kx2, False),   # original spec shape (padding path)
        ((2, C, 20, 20), kx3, True),    # exercise the two-pass streaming path
    ]
    for shape, k, force_big in cases:
        x = jax.random.normal(k, shape, dtype=jnp.float32)
        out = jax.block_until_ready(
            conv1x1_bn(x, conv_w, conv_b, bn_gamma, bn_beta,
                       force_big=force_big))
        ref = reference(x)
        assert out.shape == ref.shape
        err = float(jnp.max(jnp.abs(out - ref)))
        assert err < 2e-3, (shape, force_big, err)

    print("KERNEL_OK")
</pallas_src>

<mosaic_0001>
module attributes {stable_mosaic.version = 11 : i64} {
  func.func @_fused_small_kernel(%arg0: memref<2x3x2x128xf32, #tpu.memory_space<vmem>>, %arg1: memref<3x3xf32, #tpu.memory_space<smem>>, %arg2: memref<3xf32, #tpu.memory_space<smem>>, %arg3: memref<3xf32, #tpu.memory_space<smem>>, %arg4: memref<3xf32, #tpu.memory_space<smem>>, %arg5: memref<1xf32, #tpu.memory_space<smem>>, %arg6: memref<2x3x2x128xf32, #tpu.memory_space<vmem>>, %arg7: memref<2x3x2x128xf32, #tpu.memory_space<vmem>>) attributes {dimension_semantics = [], scalar_prefetch = 0 : i64, scratch_operands = 1 : i64, tpu.core_type = #tpu.core_type<tc>} {
    %c0 = arith.constant 0 : index
    %0 = memref.load %arg5[%c0] : memref<1xf32, #tpu.memory_space<smem>>
    %cst = arith.constant 0.000000e+00 : f32
    %1 = vector.broadcast %cst : f32 to vector<1x1xf32>
    %cst_0 = arith.constant 0.000000e+00 : f32
    %2 = vector.broadcast %cst_0 : f32 to vector<1x1xf32>
    %c0_1 = arith.constant 0 : index
    %c0_2 = arith.constant 0 : index
    %c0_3 = arith.constant 0 : index
    %c0_4 = arith.constant 0 : index
    %3 = vector.load %arg0[%c0_1, %c0_2, %c0_3, %c0_4] : memref<2x3x2x128xf32, #tpu.memory_space<vmem>>, vector<1x1x2x128xf32>
    %4 = vector.shape_cast %3 : vector<1x1x2x128xf32> to vector<2x128xf32>
    %c0_5 = arith.constant 0 : index
    %c0_6 = arith.constant 0 : index
    %5 = memref.load %arg1[%c0_5, %c0_6] : memref<3x3xf32, #tpu.memory_space<smem>>
    %6 = vector.broadcast %5 : f32 to vector<2x128xf32>
    %7 = arith.mulf %4, %6 : vector<2x128xf32>
    %c0_7 = arith.constant 0 : index
    %c1 = arith.constant 1 : index
    %c0_8 = arith.constant 0 : index
    %c0_9 = arith.constant 0 : index
    %8 = vector.load %arg0[%c0_7, %c1, %c0_8, %c0_9] : memref<2x3x2x128xf32, #tpu.memory_space<vmem>>, vector<1x1x2x128xf32>
    %9 = vector.shape_cast %8 : vector<1x1x2x128xf32> to vector<2x128xf32>
    %c0_10 = arith.constant 0 : index
    %c1_11 = arith.constant 1 : index
    %10 = memref.load %arg1[%c0_10, %c1_11] : memref<3x3xf32, #tpu.memory_space<smem>>
    %11 = vector.broadcast %10 : f32 to vector<2x128xf32>
    %12 = arith.mulf %9, %11 : vector<2x128xf32>
    %13 = arith.addf %7, %12 : vector<2x128xf32>
    %c0_12 = arith.constant 0 : index
    %c2 = arith.constant 2 : index
    %c0_13 = arith.constant 0 : index
    %c0_14 = arith.constant 0 : index
    %14 = vector.load %arg0[%c0_12, %c2, %c0_13, %c0_14] : memref<2x3x2x128xf32, #tpu.memory_space<vmem>>, vector<1x1x2x128xf32>
    %15 = vector.shape_cast %14 : vector<1x1x2x128xf32> to vector<2x128xf32>
    %c0_15 = arith.constant 0 : index
    %c2_16 = arith.constant 2 : index
    %16 = memref.load %arg1[%c0_15, %c2_16] : memref<3x3xf32, #tpu.memory_space<smem>>
    %17 = vector.broadcast %16 : f32 to vector<2x128xf32>
    %18 = arith.mulf %15, %17 : vector<2x128xf32>
    %19 = arith.addf %13, %18 : vector<2x128xf32>
    %c0_17 = arith.constant 0 : index
    %c0_18 = arith.constant 0 : index
    %c0_19 = arith.constant 0 : index
    %c0_20 = arith.constant 0 : index
    %20 = vector.load %arg7[%c0_17, %c0_18, %c0_19, %c0_20] : memref<2x3x2x128xf32, #tpu.memory_space<vmem>>, vector<1x1x2x128xf32>
    %21 = vector.shape_cast %20 : vector<1x1x2x128xf32> to vector<2x128xf32>
    %22 = vector.shape_cast %19 : vector<2x128xf32> to vector<1x1x2x128xf32>
    tpu.vector_store %arg7[%c0_17, %c0_18, %c0_19, %c0_20], %22 {strides = array<i32>} : memref<2x3x2x128xf32, #tpu.memory_space<vmem>>, vector<1x1x2x128xf32>,
    %cst_21 = arith.constant dense<0.000000e+00> : vector<2xf32>
    %23 = vector.multi_reduction <add>, %19, %cst_21 [1] : vector<2x128xf32> to vector<2xf32>
    %24 = vector.shape_cast %23 : vector<2xf32> to vector<2x1xf32>
    %cst_22 = arith.constant dense<0.000000e+00> : vector<1xf32>
    %25 = vector.multi_reduction <add>, %24, %cst_22 [0] : vector<2x1xf32> to vector<1xf32>
    %26 = vector.shape_cast %25 : vector<1xf32> to vector<1x1xf32>
    %27 = arith.addf %1, %26 : vector<1x1xf32>
    %28 = arith.mulf %19, %19 : vector<2x128xf32>
    %cst_23 = arith.constant dense<0.000000e+00> : vector<2xf32>
    %29 = vector.multi_reduction <add>, %28, %cst_23 [1] : vector<2x128xf32> to vector<2xf32>
    %30 = vector.shape_cast %29 : vector<2xf32> to vector<2x1xf32>
    %cst_24 = arith.constant dense<0.000000e+00> : vector<1xf32>
    %31 = vector.multi_reduction <add>, %30, %cst_24 [0] : vector<2x1xf32> to vector<1xf32>
    %32 = vector.shape_cast %31 : vector<1xf32> to vector<1x1xf32>
    %33 = arith.addf %2, %32 : vector<1x1xf32>
    %c1_25 = arith.constant 1 : index
    %c0_26 = arith.constant 0 : index
    %c0_27 = arith.constant 0 : index
    %c0_28 = arith.constant 0 : index
    %34 = vector.load %arg0[%c1_25, %c0_26, %c0_27, %c0_28] : memref<2x3x2x128xf32, #tpu.memory_space<vmem>>, vector<1x1x2x128xf32>
    %35 = vector.shape_cast %34 : vector<1x1x2x128xf32> to vector<2x128xf32>
    %c0_29 = arith.constant 0 : index
    %c0_30 = arith.constant 0 : index
    %36 = memref.load %arg1[%c0_29, %c0_30] : memref<3x3xf32, #tpu.memory_space<smem>>
    %37 = vector.broadcast %36 : f32 to vector<2x128xf32>
    %38 = arith.mulf %35, %37 : vector<2x128xf32>
    %c1_31 = arith.constant 1 : index
    %c1_32 = arith.constant 1 : index
    %c0_33 = arith.constant 0 : index
    %c0_34 = arith.constant 0 : index
    %39 = vector.load %arg0[%c1_31, %c1_32, %c0_33, %c0_34] : memref<2x3x2x128xf32, #tpu.memory_space<vmem>>, vector<1x1x2x128xf32>
    %40 = vector.shape_cast %39 : vector<1x1x2x128xf32> to vector<2x128xf32>
    %c0_35 = arith.constant 0 : index
    %c1_36 = arith.constant 1 : index
    %41 = memref.load %arg1[%c0_35, %c1_36] : memref<3x3xf32, #tpu.memory_space<smem>>
    %42 = vector.broadcast %41 : f32 to vector<2x128xf32>
    %43 = arith.mulf %40, %42 : vector<2x128xf32>
    %44 = arith.addf %38, %43 : vector<2x128xf32>
    %c1_37 = arith.constant 1 : index
    %c2_38 = arith.constant 2 : index
    %c0_39 = arith.constant 0 : index
    %c0_40 = arith.constant 0 : index
    %45 = vector.load %arg0[%c1_37, %c2_38, %c0_39, %c0_40] : memref<2x3x2x128xf32, #tpu.memory_space<vmem>>, vector<1x1x2x128xf32>
    %46 = vector.shape_cast %45 : vector<1x1x2x128xf32> to vector<2x128xf32>
    %c0_41 = arith.constant 0 : index
    %c2_42 = arith.constant 2 : index
    %47 = memref.load %arg1[%c0_41, %c2_42] : memref<3x3xf32, #tpu.memory_space<smem>>
    %48 = vector.broadcast %47 : f32 to vector<2x128xf32>
    %49 = arith.mulf %46, %48 : vector<2x128xf32>
    %50 = arith.addf %44, %49 : vector<2x128xf32>
    %c1_43 = arith.constant 1 : index
    %c0_44 = arith.constant 0 : index
    %c0_45 = arith.constant 0 : index
    %c0_46 = arith.constant 0 : index
    %51 = vector.load %arg7[%c1_43, %c0_44, %c0_45, %c0_46] : memref<2x3x2x128xf32, #tpu.memory_space<vmem>>, vector<1x1x2x128xf32>
    %52 = vector.shape_cast %51 : vector<1x1x2x128xf32> to vector<2x128xf32>
    %53 = vector.shape_cast %50 : vector<2x128xf32> to vector<1x1x2x128xf32>
    tpu.vector_store %arg7[%c1_43, %c0_44, %c0_45, %c0_46], %53 {strides = array<i32>} : memref<2x3x2x128xf32, #tpu.memory_space<vmem>>, vector<1x1x2x128xf32>,
    %cst_47 = arith.constant dense<0.000000e+00> : vector<2xf32>
    %54 = vector.multi_reduction <add>, %50, %cst_47 [1] : vector<2x128xf32> to vector<2xf32>
    %55 = vector.shape_cast %54 : vector<2xf32> to vector<2x1xf32>
    %cst_48 = arith.constant dense<0.000000e+00> : vector<1xf32>
    %56 = vector.multi_reduction <add>, %55, %cst_48 [0] : vector<2x1xf32> to vector<1xf32>
    %57 = vector.shape_cast %56 : vector<1xf32> to vector<1x1xf32>
    %58 = arith.addf %27, %57 : vector<1x1xf32>
    %59 = arith.mulf %50, %50 : vector<2x128xf32>
    %cst_49 = arith.constant dense<0.000000e+00> : vector<2xf32>
    %60 = vector.multi_reduction <add>, %59, %cst_49 [1] : vector<2x128xf32> to vector<2xf32>
    %61 = vector.shape_cast %60 : vector<2xf32> to vector<2x1xf32>
    %cst_50 = arith.constant dense<0.000000e+00> : vector<1xf32>
    %62 = vector.multi_reduction <add>, %61, %cst_50 [0] : vector<2x1xf32> to vector<1xf32>
    %63 = vector.shape_cast %62 : vector<1xf32> to vector<1x1xf32>
    %64 = arith.addf %33, %63 : vector<1x1xf32>
    %65 = vector.broadcast %0 : f32 to vector<1x1xf32>
    %66 = arith.mulf %58, %65 : vector<1x1xf32>
    %67 = vector.broadcast %0 : f32 to vector<1x1xf32>
    %68 = arith.mulf %64, %67 : vector<1x1xf32>
    %69 = arith.mulf %66, %66 : vector<1x1xf32>
    %70 = arith.subf %68, %69 : vector<1x1xf32>
    %cst_51 = arith.constant 0.000000e+00 : f32
    %71 = vector.broadcast %cst_51 : f32 to vector<1x1xf32>
    %72 = arith.maximumf %70, %71 : vector<1x1xf32>
    %c0_52 = arith.constant 0 : index
    %73 = memref.load %arg3[%c0_52] : memref<3xf32, #tpu.memory_space<smem>>
    %cst_53 = arith.constant 9.99999974E-6 : f32
    %74 = vector.broadcast %cst_53 : f32 to vector<1x1xf32>
    %75 = arith.addf %72, %74 : vector<1x1xf32>
    %76 = math.rsqrt %75 : vector<1x1xf32>
    %77 = vector.broadcast %73 : f32 to vector<1x1xf32>
    %78 = arith.mulf %77, %76 : vector<1x1xf32>
    %c0_54 = arith.constant 0 : index
    %79 = memref.load %arg4[%c0_54] : memref<3xf32, #tpu.memory_space<smem>>
    %80 = arith.mulf %66, %78 : vector<1x1xf32>
    %81 = vector.broadcast %79 : f32 to vector<1x1xf32>
    %82 = arith.subf %81, %80 : vector<1x1xf32>
    %c0_55 = arith.constant 0 : index
    %c0_56 = arith.constant 0 : index
    %c0_57 = arith.constant 0 : index
    %c0_58 = arith.constant 0 : index
    %83 = vector.load %arg7[%c0_55, %c0_56, %c0_57, %c0_58] : memref<2x3x2x128xf32, #tpu.memory_space<vmem>>, vector<1x1x2x128xf32>
    %84 = vector.shape_cast %83 : vector<1x1x2x128xf32> to vector<2x128xf32>
    %85 = vector.broadcast %78 : vector<1x1xf32> to vector<2x128xf32>
    %86 = arith.mulf %84, %85 : vector<2x128xf32>
    %87 = vector.broadcast %82 : vector<1x1xf32> to vector<2x128xf32>
    %88 = arith.addf %86, %87 : vector<2x128xf32>
    %c0_59 = arith.constant 0 : index
    %c0_60 = arith.constant 0 : index
    %c0_61 = arith.constant 0 : index
    %c0_62 = arith.constant 0 : index
    %89 = vector.load %arg6[%c0_59, %c0_60, %c0_61, %c0_62] : memref<2x3x2x128xf32, #tpu.memory_space<vmem>>, vector<1x1x2x128xf32>
    %90 = vector.shape_cast %89 : vector<1x1x2x128xf32> to vector<2x128xf32>
    %91 = vector.shape_cast %88 : vector<2x128xf32> to vector<1x1x2x128xf32>
    tpu.vector_store %arg6[%c0_59, %c0_60, %c0_61, %c0_62], %91 {strides = array<i32>} : memref<2x3x2x128xf32, #tpu.memory_space<vmem>>, vector<1x1x2x128xf32>,
    %c1_63 = arith.constant 1 : index
    %c0_64 = arith.constant 0 : index
    %c0_65 = arith.constant 0 : index
    %c0_66 = arith.constant 0 : index
    %92 = vector.load %arg7[%c1_63, %c0_64, %c0_65, %c0_66] : memref<2x3x2x128xf32, #tpu.memory_space<vmem>>, vector<1x1x2x128xf32>
    %93 = vector.shape_cast %92 : vector<1x1x2x128xf32> to vector<2x128xf32>
    %94 = vector.broadcast %78 : vector<1x1xf32> to vector<2x128xf32>
    %95 = arith.mulf %93, %94 : vector<2x128xf32>
    %96 = vector.broadcast %82 : vector<1x1xf32> to vector<2x128xf32>
    %97 = arith.addf %95, %96 : vector<2x128xf32>
    %c1_67 = arith.constant 1 : index
    %c0_68 = arith.constant 0 : index
    %c0_69 = arith.constant 0 : index
    %c0_70 = arith.constant 0 : index
    %98 = vector.load %arg6[%c1_67, %c0_68, %c0_69, %c0_70] : memref<2x3x2x128xf32, #tpu.memory_space<vmem>>, vector<1x1x2x128xf32>
    %99 = vector.shape_cast %98 : vector<1x1x2x128xf32> to vector<2x128xf32>
    %100 = vector.shape_cast %97 : vector<2x128xf32> to vector<1x1x2x128xf32>
    tpu.vector_store %arg6[%c1_67, %c0_68, %c0_69, %c0_70], %100 {strides = array<i32>} : memref<2x3x2x128xf32, #tpu.memory_space<vmem>>, vector<1x1x2x128xf32>,
    %cst_71 = arith.constant 0.000000e+00 : f32
    %101 = vector.broadcast %cst_71 : f32 to vector<1x1xf32>
    %cst_72 = arith.constant 0.000000e+00 : f32
    %102 = vector.broadcast %cst_72 : f32 to vector<1x1xf32>
    %c0_73 = arith.constant 0 : index
    %c0_74 = arith.constant 0 : index
    %c0_75 = arith.constant 0 : index
    %c0_76 = arith.constant 0 : index
    %103 = vector.load %arg0[%c0_73, %c0_74, %c0_75, %c0_76] : memref<2x3x2x128xf32, #tpu.memory_space<vmem>>, vector<1x1x2x128xf32>
    %104 = vector.shape_cast %103 : vector<1x1x2x128xf32> to vector<2x128xf32>
    %c1_77 = arith.constant 1 : index
    %c0_78 = arith.constant 0 : index
    %105 = memref.load %arg1[%c1_77, %c0_78] : memref<3x3xf32, #tpu.memory_space<smem>>
    %106 = vector.broadcast %105 : f32 to vector<2x128xf32>
    %107 = arith.mulf %104, %106 : vector<2x128xf32>
    %c0_79 = arith.constant 0 : index
    %c1_80 = arith.constant 1 : index
    %c0_81 = arith.constant 0 : index
    %c0_82 = arith.constant 0 : index
    %108 = vector.load %arg0[%c0_79, %c1_80, %c0_81, %c0_82] : memref<2x3x2x128xf32, #tpu.memory_space<vmem>>, vector<1x1x2x128xf32>
    %109 = vector.shape_cast %108 : vector<1x1x2x128xf32> to vector<2x128xf32>
    %c1_83 = arith.constant 1 : index
    %c1_84 = arith.constant 1 : index
    %110 = memref.load %arg1[%c1_83, %c1_84] : memref<3x3xf32, #tpu.memory_space<smem>>
    %111 = vector.broadcast %110 : f32 to vector<2x128xf32>
    %112 = arith.mulf %109, %111 : vector<2x128xf32>
    %113 = arith.addf %107, %112 : vector<2x128xf32>
    %c0_85 = arith.constant 0 : index
    %c2_86 = arith.constant 2 : index
    %c0_87 = arith.constant 0 : index
    %c0_88 = arith.constant 0 : index
    %114 = vector.load %arg0[%c0_85, %c2_86, %c0_87, %c0_88] : memref<2x3x2x128xf32, #tpu.memory_space<vmem>>, vector<1x1x2x128xf32>
    %115 = vector.shape_cast %114 : vector<1x1x2x128xf32> to vector<2x128xf32>
    %c1_89 = arith.constant 1 : index
    %c2_90 = arith.constant 2 : index
    %116 = memref.load %arg1[%c1_89, %c2_90] : memref<3x3xf32, #tpu.memory_space<smem>>
    %117 = vector.broadcast %116 : f32 to vector<2x128xf32>
    %118 = arith.mulf %115, %117 : vector<2x128xf32>
    %119 = arith.addf %113, %118 : vector<2x128xf32>
    %c0_91 = arith.constant 0 : index
    %c1_92 = arith.constant 1 : index
    %c0_93 = arith.constant 0 : index
    %c0_94 = arith.constant 0 : index
    %120 = vector.load %arg7[%c0_91, %c1_92, %c0_93, %c0_94] : memref<2x3x2x128xf32, #tpu.memory_space<vmem>>, vector<1x1x2x128xf32>
    %121 = vector.shape_cast %120 : vector<1x1x2x128xf32> to vector<2x128xf32>
    %122 = vector.shape_cast %119 : vector<2x128xf32> to vector<1x1x2x128xf32>
    tpu.vector_store %arg7[%c0_91, %c1_92, %c0_93, %c0_94], %122 {strides = array<i32>} : memref<2x3x2x128xf32, #tpu.memory_space<vmem>>, vector<1x1x2x128xf32>,
    %cst_95 = arith.constant dense<0.000000e+00> : vector<2xf32>
    %123 = vector.multi_reduction <add>, %119, %cst_95 [1] : vector<2x128xf32> to vector<2xf32>
    %124 = vector.shape_cast %123 : vector<2xf32> to vector<2x1xf32>
    %cst_96 = arith.constant dense<0.000000e+00> : vector<1xf32>
    %125 = vector.multi_reduction <add>, %124, %cst_96 [0] : vector<2x1xf32> to vector<1xf32>
    %126 = vector.shape_cast %125 : vector<1xf32> to vector<1x1xf32>
    %127 = arith.addf %101, %126 : vector<1x1xf32>
    %128 = arith.mulf %119, %119 : vector<2x128xf32>
    %cst_97 = arith.constant dense<0.000000e+00> : vector<2xf32>
    %129 = vector.multi_reduction <add>, %128, %cst_97 [1] : vector<2x128xf32> to vector<2xf32>
    %130 = vector.shape_cast %129 : vector<2xf32> to vector<2x1xf32>
    %cst_98 = arith.constant dense<0.000000e+00> : vector<1xf32>
    %131 = vector.multi_reduction <add>, %130, %cst_98 [0] : vector<2x1xf32> to vector<1xf32>
    %132 = vector.shape_cast %131 : vector<1xf32> to vector<1x1xf32>
    %133 = arith.addf %102, %132 : vector<1x1xf32>
    %c1_99 = arith.constant 1 : index
    %c0_100 = arith.constant 0 : index
    %c0_101 = arith.constant 0 : index
    %c0_102 = arith.constant 0 : index
    %134 = vector.load %arg0[%c1_99, %c0_100, %c0_101, %c0_102] : memref<2x3x2x128xf32, #tpu.memory_space<vmem>>, vector<1x1x2x128xf32>
    %135 = vector.shape_cast %134 : vector<1x1x2x128xf32> to vector<2x128xf32>
    %c1_103 = arith.constant 1 : index
    %c0_104 = arith.constant 0 : index
    %136 = memref.load %arg1[%c1_103, %c0_104] : memref<3x3xf32, #tpu.memory_space<smem>>
    %137 = vector.broadcast %136 : f32 to vector<2x128xf32>
    %138 = arith.mulf %135, %137 : vector<2x128xf32>
    %c1_105 = arith.constant 1 : index
    %c1_106 = arith.constant 1 : index
    %c0_107 = arith.constant 0 : index
    %c0_108 = arith.constant 0 : index
    %139 = vector.load %arg0[%c1_105, %c1_106, %c0_107, %c0_108] : memref<2x3x2x128xf32, #tpu.memory_space<vmem>>, vector<1x1x2x128xf32>
    %140 = vector.shape_cast %139 : vector<1x1x2x128xf32> to vector<2x128xf32>
    %c1_109 = arith.constant 1 : index
    %c1_110 = arith.constant 1 : index
    %141 = memref.load %arg1[%c1_109, %c1_110] : memref<3x3xf32, #tpu.memory_space<smem>>
    %142 = vector.broadcast %141 : f32 to vector<2x128xf32>
    %143 = arith.mulf %140, %142 : vector<2x128xf32>
    %144 = arith.addf %138, %143 : vector<2x128xf32>
    %c1_111 = arith.constant 1 : index
    %c2_112 = arith.constant 2 : index
    %c0_113 = arith.constant 0 : index
    %c0_114 = arith.constant 0 : index
    %145 = vector.load %arg0[%c1_111, %c2_112, %c0_113, %c0_114] : memref<2x3x2x128xf32, #tpu.memory_space<vmem>>, vector<1x1x2x128xf32>
    %146 = vector.shape_cast %145 : vector<1x1x2x128xf32> to vector<2x128xf32>
    %c1_115 = arith.constant 1 : index
    %c2_116 = arith.constant 2 : index
    %147 = memref.load %arg1[%c1_115, %c2_116] : memref<3x3xf32, #tpu.memory_space<smem>>
    %148 = vector.broadcast %147 : f32 to vector<2x128xf32>
    %149 = arith.mulf %146, %148 : vector<2x128xf32>
    %150 = arith.addf %144, %149 : vector<2x128xf32>
    %c1_117 = arith.constant 1 : index
    %c1_118 = arith.constant 1 : index
    %c0_119 = arith.constant 0 : index
    %c0_120 = arith.constant 0 : index
    %151 = vector.load %arg7[%c1_117, %c1_118, %c0_119, %c0_120] : memref<2x3x2x128xf32, #tpu.memory_space<vmem>>, vector<1x1x2x128xf32>
    %152 = vector.shape_cast %151 : vector<1x1x2x128xf32> to vector<2x128xf32>
    %153 = vector.shape_cast %150 : vector<2x128xf32> to vector<1x1x2x128xf32>
    tpu.vector_store %arg7[%c1_117, %c1_118, %c0_119, %c0_120], %153 {strides = array<i32>} : memref<2x3x2x128xf32, #tpu.memory_space<vmem>>, vector<1x1x2x128xf32>,
    %cst_121 = arith.constant dense<0.000000e+00> : vector<2xf32>
    %154 = vector.multi_reduction <add>, %150, %cst_121 [1] : vector<2x128xf32> to vector<2xf32>
    %155 = vector.shape_cast %154 : vector<2xf32> to vector<2x1xf32>
    %cst_122 = arith.constant dense<0.000000e+00> : vector<1xf32>
    %156 = vector.multi_reduction <add>, %155, %cst_122 [0] : vector<2x1xf32> to vector<1xf32>
    %157 = vector.shape_cast %156 : vector<1xf32> to vector<1x1xf32>
    %158 = arith.addf %127, %157 : vector<1x1xf32>
    %159 = arith.mulf %150, %150 : vector<2x128xf32>
    %cst_123 = arith.constant dense<0.000000e+00> : vector<2xf32>
    %160 = vector.multi_reduction <add>, %159, %cst_123 [1] : vector<2x128xf32> to vector<2xf32>
    %161 = vector.shape_cast %160 : vector<2xf32> to vector<2x1xf32>
    %cst_124 = arith.constant dense<0.000000e+00> : vector<1xf32>
    %162 = vector.multi_reduction <add>, %161, %cst_124 [0] : vector<2x1xf32> to vector<1xf32>
    %163 = vector.shape_cast %162 : vector<1xf32> to vector<1x1xf32>
    %164 = arith.addf %133, %163 : vector<1x1xf32>
    %165 = vector.broadcast %0 : f32 to vector<1x1xf32>
    %166 = arith.mulf %158, %165 : vector<1x1xf32>
    %167 = vector.broadcast %0 : f32 to vector<1x1xf32>
    %168 = arith.mulf %164, %167 : vector<1x1xf32>
    %169 = arith.mulf %166, %166 : vector<1x1xf32>
    %170 = arith.subf %168, %169 : vector<1x1xf32>
    %cst_125 = arith.constant 0.000000e+00 : f32
    %171 = vector.broadcast %cst_125 : f32 to vector<1x1xf32>
    %172 = arith.maximumf %170, %171 : vector<1x1xf32>
    %c1_126 = arith.constant 1 : index
    %173 = memref.load %arg3[%c1_126] : memref<3xf32, #tpu.memory_space<smem>>
    %cst_127 = arith.constant 9.99999974E-6 : f32
    %174 = vector.broadcast %cst_127 : f32 to vector<1x1xf32>
    %175 = arith.addf %172, %174 : vector<1x1xf32>
    %176 = math.rsqrt %175 : vector<1x1xf32>
    %177 = vector.broadcast %173 : f32 to vector<1x1xf32>
    %178 = arith.mulf %177, %176 : vector<1x1xf32>
    %c1_128 = arith.constant 1 : index
    %179 = memref.load %arg4[%c1_128] : memref<3xf32, #tpu.memory_space<smem>>
    %180 = arith.mulf %166, %178 : vector<1x1xf32>
    %181 = vector.broadcast %179 : f32 to vector<1x1xf32>
    %182 = arith.subf %181, %180 : vector<1x1xf32>
    %c0_129 = arith.constant 0 : index
    %c1_130 = arith.constant 1 : index
    %c0_131 = arith.constant 0 : index
    %c0_132 = arith.constant 0 : index
    %183 = vector.load %arg7[%c0_129, %c1_130, %c0_131, %c0_132] : memref<2x3x2x128xf32, #tpu.memory_space<vmem>>, vector<1x1x2x128xf32>
    %184 = vector.shape_cast %183 : vector<1x1x2x128xf32> to vector<2x128xf32>
    %185 = vector.broadcast %178 : vector<1x1xf32> to vector<2x128xf32>
    %186 = arith.mulf %184, %185 : vector<2x128xf32>
    %187 = vector.broadcast %182 : vector<1x1xf32> to vector<2x128xf32>
    %188 = arith.addf %186, %187 : vector<2x128xf32>
    %c0_133 = arith.constant 0 : index
    %c1_134 = arith.constant 1 : index
    %c0_135 = arith.constant 0 : index
    %c0_136 = arith.constant 0 : index
    %189 = vector.load %arg6[%c0_133, %c1_134, %c0_135, %c0_136] : memref<2x3x2x128xf32, #tpu.memory_space<vmem>>, vector<1x1x2x128xf32>
    %190 = vector.shape_cast %189 : vector<1x1x2x128xf32> to vector<2x128xf32>
    %191 = vector.shape_cast %188 : vector<2x128xf32> to vector<1x1x2x128xf32>
    tpu.vector_store %arg6[%c0_133, %c1_134, %c0_135, %c0_136], %191 {strides = array<i32>} : memref<2x3x2x128xf32, #tpu.memory_space<vmem>>, vector<1x1x2x128xf32>,
    %c1_137 = arith.constant 1 : index
    %c1_138 = arith.constant 1 : index
    %c0_139 = arith.constant 0 : index
    %c0_140 = arith.constant 0 : index
    %192 = vector.load %arg7[%c1_137, %c1_138, %c0_139, %c0_140] : memref<2x3x2x128xf32, #tpu.memory_space<vmem>>, vector<1x1x2x128xf32>
    %193 = vector.shape_cast %192 : vector<1x1x2x128xf32> to vector<2x128xf32>
    %194 = vector.broadcast %178 : vector<1x1xf32> to vector<2x128xf32>
    %195 = arith.mulf %193, %194 : vector<2x128xf32>
    %196 = vector.broadcast %182 : vector<1x1xf32> to vector<2x128xf32>
    %197 = arith.addf %195, %196 : vector<2x128xf32>
    %c1_141 = arith.constant 1 : index
    %c1_142 = arith.constant 1 : index
    %c0_143 = arith.constant 0 : index
    %c0_144 = arith.constant 0 : index
    %198 = vector.load %arg6[%c1_141, %c1_142, %c0_143, %c0_144] : memref<2x3x2x128xf32, #tpu.memory_space<vmem>>, vector<1x1x2x128xf32>
    %199 = vector.shape_cast %198 : vector<1x1x2x128xf32> to vector<2x128xf32>
    %200 = vector.shape_cast %197 : vector<2x128xf32> to vector<1x1x2x128xf32>
    tpu.vector_store %arg6[%c1_141, %c1_142, %c0_143, %c0_144], %200 {strides = array<i32>} : memref<2x3x2x128xf32, #tpu.memory_space<vmem>>, vector<1x1x2x128xf32>,
    %cst_145 = arith.constant 0.000000e+00 : f32
    %201 = vector.broadcast %cst_145 : f32 to vector<1x1xf32>
    %cst_146 = arith.constant 0.000000e+00 : f32
    %202 = vector.broadcast %cst_146 : f32 to vector<1x1xf32>
    %c0_147 = arith.constant 0 : index
    %c0_148 = arith.constant 0 : index
    %c0_149 = arith.constant 0 : index
    %c0_150 = arith.constant 0 : index
    %203 = vector.load %arg0[%c0_147, %c0_148, %c0_149, %c0_150] : memref<2x3x2x128xf32, #tpu.memory_space<vmem>>, vector<1x1x2x128xf32>
    %204 = vector.shape_cast %203 : vector<1x1x2x128xf32> to vector<2x128xf32>
    %c2_151 = arith.constant 2 : index
    %c0_152 = arith.constant 0 : index
    %205 = memref.load %arg1[%c2_151, %c0_152] : memref<3x3xf32, #tpu.memory_space<smem>>
    %206 = vector.broadcast %205 : f32 to vector<2x128xf32>
    %207 = arith.mulf %204, %206 : vector<2x128xf32>
    %c0_153 = arith.constant 0 : index
    %c1_154 = arith.constant 1 : index
    %c0_155 = arith.constant 0 : index
    %c0_156 = arith.constant 0 : index
    %208 = vector.load %arg0[%c0_153, %c1_154, %c0_155, %c0_156] : memref<2x3x2x128xf32, #tpu.memory_space<vmem>>, vector<1x1x2x128xf32>
    %209 = vector.shape_cast %208 : vector<1x1x2x128xf32> to vector<2x128xf32>
    %c2_157 = arith.constant 2 : index
    %c1_158 = arith.constant 1 : index
    %210 = memref.load %arg1[%c2_157, %c1_158] : memref<3x3xf32, #tpu.memory_space<smem>>
    %211 = vector.broadcast %210 : f32 to vector<2x128xf32>
    %212 = arith.mulf %209, %211 : vector<2x128xf32>
    %213 = arith.addf %207, %212 : vector<2x128xf32>
    %c0_159 = arith.constant 0 : index
    %c2_160 = arith.constant 2 : index
    %c0_161 = arith.constant 0 : index
    %c0_162 = arith.constant 0 : index
    %214 = vector.load %arg0[%c0_159, %c2_160, %c0_161, %c0_162] : memref<2x3x2x128xf32, #tpu.memory_space<vmem>>, vector<1x1x2x128xf32>
    %215 = vector.shape_cast %214 : vector<1x1x2x128xf32> to vector<2x128xf32>
    %c2_163 = arith.constant 2 : index
    %c2_164 = arith.constant 2 : index
    %216 = memref.load %arg1[%c2_163, %c2_164] : memref<3x3xf32, #tpu.memory_space<smem>>
    %217 = vector.broadcast %216 : f32 to vector<2x128xf32>
    %218 = arith.mulf %215, %217 : vector<2x128xf32>
    %219 = arith.addf %213, %218 : vector<2x128xf32>
    %c0_165 = arith.constant 0 : index
    %c2_166 = arith.constant 2 : index
    %c0_167 = arith.constant 0 : index
    %c0_168 = arith.constant 0 : index
    %220 = vector.load %arg7[%c0_165, %c2_166, %c0_167, %c0_168] : memref<2x3x2x128xf32, #tpu.memory_space<vmem>>, vector<1x1x2x128xf32>
    %221 = vector.shape_cast %220 : vector<1x1x2x128xf32> to vector<2x128xf32>
    %222 = vector.shape_cast %219 : vector<2x128xf32> to vector<1x1x2x128xf32>
    tpu.vector_store %arg7[%c0_165, %c2_166, %c0_167, %c0_168], %222 {strides = array<i32>} : memref<2x3x2x128xf32, #tpu.memory_space<vmem>>, vector<1x1x2x128xf32>,
    %cst_169 = arith.constant dense<0.000000e+00> : vector<2xf32>
    %223 = vector.multi_reduction <add>, %219, %cst_169 [1] : vector<2x128xf32> to vector<2xf32>
    %224 = vector.shape_cast %223 : vector<2xf32> to vector<2x1xf32>
    %cst_170 = arith.constant dense<0.000000e+00> : vector<1xf32>
    %225 = vector.multi_reduction <add>, %224, %cst_170 [0] : vector<2x1xf32> to vector<1xf32>
    %226 = vector.shape_cast %225 : vector<1xf32> to vector<1x1xf32>
    %227 = arith.addf %201, %226 : vector<1x1xf32>
    %228 = arith.mulf %219, %219 : vector<2x128xf32>
    %cst_171 = arith.constant dense<0.000000e+00> : vector<2xf32>
    %229 = vector.multi_reduction <add>, %228, %cst_171 [1] : vector<2x128xf32> to vector<2xf32>
    %230 = vector.shape_cast %229 : vector<2xf32> to vector<2x1xf32>
    %cst_172 = arith.constant dense<0.000000e+00> : vector<1xf32>
    %231 = vector.multi_reduction <add>, %230, %cst_172 [0] : vector<2x1xf32> to vector<1xf32>
    %232 = vector.shape_cast %231 : vector<1xf32> to vector<1x1xf32>
    %233 = arith.addf %202, %232 : vector<1x1xf32>
    %c1_173 = arith.constant 1 : index
    %c0_174 = arith.constant 0 : index
    %c0_175 = arith.constant 0 : index
    %c0_176 = arith.constant 0 : index
    %234 = vector.load %arg0[%c1_173, %c0_174, %c0_175, %c0_176] : memref<2x3x2x128xf32, #tpu.memory_space<vmem>>, vector<1x1x2x128xf32>
    %235 = vector.shape_cast %234 : vector<1x1x2x128xf32> to vector<2x128xf32>
    %c2_177 = arith.constant 2 : index
    %c0_178 = arith.constant 0 : index
    %236 = memref.load %arg1[%c2_177, %c0_178] : memref<3x3xf32, #tpu.memory_space<smem>>
    %237 = vector.broadcast %236 : f32 to vector<2x128xf32>
    %238 = arith.mulf %235, %237 : vector<2x128xf32>
    %c1_179 = arith.constant 1 : index
    %c1_180 = arith.constant 1 : index
    %c0_181 = arith.constant 0 : index
    %c0_182 = arith.constant 0 : index
    %239 = vector.load %arg0[%c1_179, %c1_180, %c0_181, %c0_182] : memref<2x3x2x128xf32, #tpu.memory_space<vmem>>, vector<1x1x2x128xf32>
    %240 = vector.shape_cast %239 : vector<1x1x2x128xf32> to vector<2x128xf32>
    %c2_183 = arith.constant 2 : index
    %c1_184 = arith.constant 1 : index
    %241 = memref.load %arg1[%c2_183, %c1_184] : memref<3x3xf32, #tpu.memory_space<smem>>
    %242 = vector.broadcast %241 : f32 to vector<2x128xf32>
    %243 = arith.mulf %240, %242 : vector<2x128xf32>
    %244 = arith.addf %238, %243 : vector<2x128xf32>
    %c1_185 = arith.constant 1 : index
    %c2_186 = arith.constant 2 : index
    %c0_187 = arith.constant 0 : index
    %c0_188 = arith.constant 0 : index
    %245 = vector.load %arg0[%c1_185, %c2_186, %c0_187, %c0_188] : memref<2x3x2x128xf32, #tpu.memory_space<vmem>>, vector<1x1x2x128xf32>
    %246 = vector.shape_cast %245 : vector<1x1x2x128xf32> to vector<2x128xf32>
    %c2_189 = arith.constant 2 : index
    %c2_190 = arith.constant 2 : index
    %247 = memref.load %arg1[%c2_189, %c2_190] : memref<3x3xf32, #tpu.memory_space<smem>>
    %248 = vector.broadcast %247 : f32 to vector<2x128xf32>
    %249 = arith.mulf %246, %248 : vector<2x128xf32>
    %250 = arith.addf %244, %249 : vector<2x128xf32>
    %c1_191 = arith.constant 1 : index
    %c2_192 = arith.constant 2 : index
    %c0_193 = arith.constant 0 : index
    %c0_194 = arith.constant 0 : index
    %251 = vector.load %arg7[%c1_191, %c2_192, %c0_193, %c0_194] : memref<2x3x2x128xf32, #tpu.memory_space<vmem>>, vector<1x1x2x128xf32>
    %252 = vector.shape_cast %251 : vector<1x1x2x128xf32> to vector<2x128xf32>
    %253 = vector.shape_cast %250 : vector<2x128xf32> to vector<1x1x2x128xf32>
    tpu.vector_store %arg7[%c1_191, %c2_192, %c0_193, %c0_194], %253 {strides = array<i32>} : memref<2x3x2x128xf32, #tpu.memory_space<vmem>>, vector<1x1x2x128xf32>,
    %cst_195 = arith.constant dense<0.000000e+00> : vector<2xf32>
    %254 = vector.multi_reduction <add>, %250, %cst_195 [1] : vector<2x128xf32> to vector<2xf32>
    %255 = vector.shape_cast %254 : vector<2xf32> to vector<2x1xf32>
    %cst_196 = arith.constant dense<0.000000e+00> : vector<1xf32>
    %256 = vector.multi_reduction <add>, %255, %cst_196 [0] : vector<2x1xf32> to vector<1xf32>
    %257 = vector.shape_cast %256 : vector<1xf32> to vector<1x1xf32>
    %258 = arith.addf %227, %257 : vector<1x1xf32>
    %259 = arith.mulf %250, %250 : vector<2x128xf32>
    %cst_197 = arith.constant dense<0.000000e+00> : vector<2xf32>
    %260 = vector.multi_reduction <add>, %259, %cst_197 [1] : vector<2x128xf32> to vector<2xf32>
    %261 = vector.shape_cast %260 : vector<2xf32> to vector<2x1xf32>
    %cst_198 = arith.constant dense<0.000000e+00> : vector<1xf32>
    %262 = vector.multi_reduction <add>, %261, %cst_198 [0] : vector<2x1xf32> to vector<1xf32>
    %263 = vector.shape_cast %262 : vector<1xf32> to vector<1x1xf32>
    %264 = arith.addf %233, %263 : vector<1x1xf32>
    %265 = vector.broadcast %0 : f32 to vector<1x1xf32>
    %266 = arith.mulf %258, %265 : vector<1x1xf32>
    %267 = vector.broadcast %0 : f32 to vector<1x1xf32>
    %268 = arith.mulf %264, %267 : vector<1x1xf32>
    %269 = arith.mulf %266, %266 : vector<1x1xf32>
    %270 = arith.subf %268, %269 : vector<1x1xf32>
    %cst_199 = arith.constant 0.000000e+00 : f32
    %271 = vector.broadcast %cst_199 : f32 to vector<1x1xf32>
    %272 = arith.maximumf %270, %271 : vector<1x1xf32>
    %c2_200 = arith.constant 2 : index
    %273 = memref.load %arg3[%c2_200] : memref<3xf32, #tpu.memory_space<smem>>
    %cst_201 = arith.constant 9.99999974E-6 : f32
    %274 = vector.broadcast %cst_201 : f32 to vector<1x1xf32>
    %275 = arith.addf %272, %274 : vector<1x1xf32>
    %276 = math.rsqrt %275 : vector<1x1xf32>
    %277 = vector.broadcast %273 : f32 to vector<1x1xf32>
    %278 = arith.mulf %277, %276 : vector<1x1xf32>
    %c2_202 = arith.constant 2 : index
    %279 = memref.load %arg4[%c2_202] : memref<3xf32, #tpu.memory_space<smem>>
    %280 = arith.mulf %266, %278 : vector<1x1xf32>
    %281 = vector.broadcast %279 : f32 to vector<1x1xf32>
    %282 = arith.subf %281, %280 : vector<1x1xf32>
    %c0_203 = arith.constant 0 : index
    %c2_204 = arith.constant 2 : index
    %c0_205 = arith.constant 0 : index
    %c0_206 = arith.constant 0 : index
    %283 = vector.load %arg7[%c0_203, %c2_204, %c0_205, %c0_206] : memref<2x3x2x128xf32, #tpu.memory_space<vmem>>, vector<1x1x2x128xf32>
    %284 = vector.shape_cast %283 : vector<1x1x2x128xf32> to vector<2x128xf32>
    %285 = vector.broadcast %278 : vector<1x1xf32> to vector<2x128xf32>
    %286 = arith.mulf %284, %285 : vector<2x128xf32>
    %287 = vector.broadcast %282 : vector<1x1xf32> to vector<2x128xf32>
    %288 = arith.addf %286, %287 : vector<2x128xf32>
    %c0_207 = arith.constant 0 : index
    %c2_208 = arith.constant 2 : index
    %c0_209 = arith.constant 0 : index
    %c0_210 = arith.constant 0 : index
    %289 = vector.load %arg6[%c0_207, %c2_208, %c0_209, %c0_210] : memref<2x3x2x128xf32, #tpu.memory_space<vmem>>, vector<1x1x2x128xf32>
    %290 = vector.shape_cast %289 : vector<1x1x2x128xf32> to vector<2x128xf32>
    %291 = vector.shape_cast %288 : vector<2x128xf32> to vector<1x1x2x128xf32>
    tpu.vector_store %arg6[%c0_207, %c2_208, %c0_209, %c0_210], %291 {strides = array<i32>} : memref<2x3x2x128xf32, #tpu.memory_space<vmem>>, vector<1x1x2x128xf32>,
    %c1_211 = arith.constant 1 : index
    %c2_212 = arith.constant 2 : index
    %c0_213 = arith.constant 0 : index
    %c0_214 = arith.constant 0 : index
    %292 = vector.load %arg7[%c1_211, %c2_212, %c0_213, %c0_214] : memref<2x3x2x128xf32, #tpu.memory_space<vmem>>, vector<1x1x2x128xf32>
    %293 = vector.shape_cast %292 : vector<1x1x2x128xf32> to vector<2x128xf32>
    %294 = vector.broadcast %278 : vector<1x1xf32> to vector<2x128xf32>
    %295 = arith.mulf %293, %294 : vector<2x128xf32>
    %296 = vector.broadcast %282 : vector<1x1xf32> to vector<2x128xf32>
    %297 = arith.addf %295, %296 : vector<2x128xf32>
    %c1_215 = arith.constant 1 : index
    %c2_216 = arith.constant 2 : index
    %c0_217 = arith.constant 0 : index
    %c0_218 = arith.constant 0 : index
    %298 = vector.load %arg6[%c1_215, %c2_216, %c0_217, %c0_218] : memref<2x3x2x128xf32, #tpu.memory_space<vmem>>, vector<1x1x2x128xf32>
    %299 = vector.shape_cast %298 : vector<1x1x2x128xf32> to vector<2x128xf32>
    %300 = vector.shape_cast %297 : vector<2x128xf32> to vector<1x1x2x128xf32>
    tpu.vector_store %arg6[%c1_215, %c2_216, %c0_217, %c0_218], %300 {strides = array<i32>} : memref<2x3x2x128xf32, #tpu.memory_space<vmem>>, vector<1x1x2x128xf32>,
    return
  }
}

</mosaic_0001>

<llo_original>
// kernel: conv1x1_bn.1
$region0: #{conv1x1_bn.1}
  #allocation0 [shape = 'u32[]', space=smem, size = 0x4, offset = 0x4, fixed_abs, tag = 'smem constant byte address 0x4 - core index']
  #allocation1 [shape = 'u32[144,128]{1,0:T(1,128)}', space=vmem, size = 0x12000, scoped, tag = 'internal scratch']
  #allocation2 [shape = 'f32[2,3,2,128]{3,2,1,0:T(2,128)}', space=vmem, size = 0x1800, scoped, tag = 'scratch operand']
  #allocation3 [shape = 'f32[1]{0:T(128)S(6)}', space=smem, size = 0x200, scoped, tag = 'scoped memory for conv1x1_bn.1']
  %s0 = inlined_call_operand.vmem [shape: f32[2,3,2,128], index: 0, kind: input, shape index: {}]
  %s1 = inlined_call_operand.vmem [shape: f32[3,3], index: 1, kind: input, shape index: {}]
  %s2 = inlined_call_operand.vmem [shape: f32[3], index: 2, kind: input, shape index: {}]
  %s3 = inlined_call_operand.vmem [shape: f32[3], index: 3, kind: input, shape index: {}]
  %s4 = inlined_call_operand.vmem [shape: f32[3], index: 4, kind: input, shape index: {}]
  %s5 = inlined_call_operand.<no memory space> [shape: f32[1], index: 5, kind: input, shape index: {}]
  %s6 = inlined_call_operand.vmem [shape: f32[2,3,2,128], index: 6, kind: output, shape index: {}]
  %s7 = sld [smem:[#allocation0]]
  $region50: #{conv1x1_bn.1} parent=0
    _
  %s9 = ssub.s32 1, %s7
  %s10 = scalar_select 0, %s9, %s7
  %11 = sst [smem:[#allocation3]] %s5
  $region1: #{conv1x1_bn.1} parent=0
    #allocation4 [shape = 'u8[2048]{0}', space=smem, size = 0x800, scoped, tag = 'input window, operand 1, single buffered']
    #allocation5 [shape = 's32[1]{0}', space=sflag, size = 0x4, scoped, tag = 'scoped memory for conv1x1_bn.1']
    #allocation6 [shape = 'u8[512]{0}', space=smem, size = 0x200, scoped, tag = 'input window, operand 2, single buffered']
    #allocation7 [shape = 's32[1]{0}', space=sflag, size = 0x4, scoped, tag = 'scoped memory for conv1x1_bn.1']
    #allocation8 [shape = 'u8[512]{0}', space=smem, size = 0x200, scoped, tag = 'input window, operand 3, single buffered']
    #allocation9 [shape = 'u8[512]{0}', space=smem, size = 0x200, scoped, tag = 'input window, operand 4, single buffered']
    #allocation10 [shape = 's32[1]{0}', space=sflag, size = 0x4, scoped, tag = 'scoped memory for conv1x1_bn.1']
    %12 = vsyncpa [#allocation5], 0
    %13 = vsyncpa [#allocation7], 0
    %14 = vsyncpa [#allocation10], 0
    // Predicated region
    $region2: #{conv1x1_bn.1} parent=1 // pred_check
      _
    $region3: #{conv1x1_bn.1} parent=1 // pred_check_branch
      %16 = sbr.rel (0) target = $region5
    $region4: #{conv1x1_bn.1} parent=1 // pred_region
      _
    $region5: #{conv1x1_bn.1} parent=1 // pred_fallthru
      _
    // Predicated region
    $region6: #{conv1x1_bn.1} parent=1 // pred_check
      _
    $region7: #{conv1x1_bn.1} parent=1 // pred_check_branch
      %18 = sbr.rel (0) target = $region9
    $region8: #{conv1x1_bn.1} parent=1 // pred_region
      %s20 = ssub.s32 64, 64
      %21 = vsyncadd [#allocation5], %s20
      %s23 = sshll.u32 %s1, 4
      %s24 = int_to_ptr.vmem [resolvable:$true] %s23
      %26 = dma.vmem_to_smem %s24, 64, [#allocation4], [#allocation5]
    $region9: #{conv1x1_bn.1} parent=1 // pred_fallthru
      _
    // Predicated region
    $region10: #{conv1x1_bn.1} parent=1 // pred_check
      _
    $region11: #{conv1x1_bn.1} parent=1 // pred_check_branch
      %28 = sbr.rel (0) target = $region13
    $region12: #{conv1x1_bn.1} parent=1 // pred_region
      %s30 = ssub.s32 16, 16
      %31 = vsyncadd [#allocation7], %s30
      %s33 = sshll.u32 %s2, 4
      %s34 = int_to_ptr.vmem [resolvable:$true] %s33
      %36 = dma.vmem_to_smem %s34, 16, [#allocation6], [#allocation7]
    $region13: #{conv1x1_bn.1} parent=1 // pred_fallthru
      _
    // Predicated region
    $region14: #{conv1x1_bn.1} parent=1 // pred_check
      _
    $region15: #{conv1x1_bn.1} parent=1 // pred_check_branch
      %38 = sbr.rel (0) target = $region17
    $region16: #{conv1x1_bn.1} parent=1 // pred_region
      %s40 = ssub.s32 16, 16
      %41 = vsyncadd [#allocation7], %s40
      %s43 = sshll.u32 %s3, 4
      %s44 = int_to_ptr.vmem [resolvable:$true] %s43
      %46 = dma.vmem_to_smem %s44, 16, [#allocation8], [#allocation7]
    $region17: #{conv1x1_bn.1} parent=1 // pred_fallthru
      _
    // Predicated region
    $region18: #{conv1x1_bn.1} parent=1 // pred_check
      _
    $region19: #{conv1x1_bn.1} parent=1 // pred_check_branch
      %48 = sbr.rel (0) target = $region21
    $region20: #{conv1x1_bn.1} parent=1 // pred_region
      %s50 = ssub.s32 16, 16
      %51 = vsyncadd [#allocation10], %s50
      %s53 = sshll.u32 %s4, 4
      %s54 = int_to_ptr.vmem [resolvable:$true] %s53
      %56 = dma.vmem_to_smem %s54, 16, [#allocation9], [#allocation10]
    $region21: #{conv1x1_bn.1} parent=1 // pred_fallthru
      _
    // Predicated region
    $region22: #{conv1x1_bn.1} parent=1 // pred_check
      _
    $region23: #{conv1x1_bn.1} parent=1 // pred_check_branch
      %58 = sbr.rel (0) target = $region25
    $region24: #{conv1x1_bn.1} parent=1 // pred_region
      _
    $region25: #{conv1x1_bn.1} parent=1 // pred_fallthru
      _
    // Predicated region
    $region26: #{conv1x1_bn.1} parent=1 // pred_check
      _
    $region27: #{conv1x1_bn.1} parent=1 // pred_check_branch
      %60 = sbr.rel (0) target = $region29
    $region28: #{conv1x1_bn.1} parent=1 // pred_region
      %61 = dma.done [#allocation5], 64
    $region29: #{conv1x1_bn.1} parent=1 // pred_fallthru
      _
    // Predicated region
    $region30: #{conv1x1_bn.1} parent=1 // pred_check
      _
    $region31: #{conv1x1_bn.1} parent=1 // pred_check_branch
      %63 = sbr.rel (0) target = $region33
    $region32: #{conv1x1_bn.1} parent=1 // pred_region
      %64 = dma.done [#allocation7], 16
    $region33: #{conv1x1_bn.1} parent=1 // pred_fallthru
      _
    // Predicated region
    $region34: #{conv1x1_bn.1} parent=1 // pred_check
      _
    $region35: #{conv1x1_bn.1} parent=1 // pred_check_branch
      %66 = sbr.rel (0) target = $region37
    $region36: #{conv1x1_bn.1} parent=1 // pred_region
      %67 = dma.done [#allocation7], 16
    $region37: #{conv1x1_bn.1} parent=1 // pred_fallthru
      _
    // Predicated region
    $region38: #{conv1x1_bn.1} parent=1 // pred_check
      _
    $region39: #{conv1x1_bn.1} parent=1 // pred_check_branch
      %69 = sbr.rel (0) target = $region41
    $region40: #{conv1x1_bn.1} parent=1 // pred_region
      %70 = dma.done [#allocation10], 16
    $region41: #{conv1x1_bn.1} parent=1 // pred_fallthru
      _
    %71 = sfence
    %s72 = sld [smem:[#allocation3]]
    %v73 = vld [vmem:[%s0] sm:$0x3]
    %s74 = sld [smem:[#allocation4]]
    %v75 = vstv %s74
    %v76 = vmul.f32 %v73, %v75
    %s77 = scalar_lea.vmem %s0, 2
    %v78 = vld [vmem:[%s77] sm:$0x3]
    %s79 = sld [smem:[#allocation4 + $0x1]]
    %v80 = vstv %s79
    %v81 = vmul.f32 %v78, %v80
    %v82 = vadd.f32 %v76, %v81
    %s83 = scalar_lea.vmem %s0, 4
    %v84 = vld [vmem:[%s83] sm:$0x3]
    %s85 = sld [smem:[#allocation4 + $0x2]]
    %v86 = vstv %s85
    %v87 = vmul.f32 %v84, %v86
    %v88 = vadd.f32 %v82, %v87
    %89 = vst [vmem:[#allocation2] sm:$0x3] %v88
    %vm90 = vcmask 1041408
    %v91 = vsel %vm90, %v88, 0.0
    %92 = vadd.xlane.f32.xlu0 %v91
    %v93 = vpop.xlane.xlu0 %92
    %v94 = vsel %vm90, %v93, 0.0
    %v95 = vrot.slane %v94, 4
    %v96 = vadd.f32 %v94, %v95
    %v97 = vrot.slane %v96, 2
    %v98 = vadd.f32 %v96, %v97
    %v99 = vrot.slane %v98, 1
    %v100 = vadd.f32 %v98, %v99
    %v101 = vadd.f32 %v100, 0.0
    %v102 = vmul.f32 %v88, %v88
    %v103 = vsel %vm90, %v102, 0.0
    %104 = vadd.xlane.f32.xlu0 %v103
    %v105 = vpop.xlane.xlu0 %104
    %v106 = vsel %vm90, %v105, 0.0
    %v107 = vrot.slane %v106, 4
    %v108 = vadd.f32 %v106, %v107
    %v109 = vrot.slane %v108, 2
    %v110 = vadd.f32 %v108, %v109
    %v111 = vrot.slane %v110, 1
    %v112 = vadd.f32 %v110, %v111
    %v113 = vadd.f32 %v112, 0.0
    %s114 = scalar_lea.vmem %s0, 6
    %v115 = vld [vmem:[%s114] sm:$0x3]
    %s116 = sld [smem:[#allocation4]]
    %v117 = vstv %s116
    %v118 = vmul.f32 %v115, %v117
    %s119 = scalar_lea.vmem %s0, 8
    %v120 = vld [vmem:[%s119] sm:$0x3]
    %s121 = sld [smem:[#allocation4 + $0x1]]
    %v122 = vstv %s121
    %v123 = vmul.f32 %v120, %v122
    %v124 = vadd.f32 %v118, %v123
    %s125 = scalar_lea.vmem %s0, 10
    %v126 = vld [vmem:[%s125] sm:$0x3]
    %s127 = sld [smem:[#allocation4 + $0x2]]
    %v128 = vstv %s127
    %v129 = vmul.f32 %v126, %v128
    %v130 = vadd.f32 %v124, %v129
    %s131 = scalar_lea.vmem [#allocation2], 6
    %132 = vst [vmem:[%s131] sm:$0x3] %v130
    %v133 = vsel %vm90, %v130, 0.0
    %134 = vadd.xlane.f32.xlu0 %v133
    %v135 = vpop.xlane.xlu0 %134
    %v136 = vsel %vm90, %v135, 0.0
    %v137 = vrot.slane %v136, 4
    %v138 = vadd.f32 %v136, %v137
    %v139 = vrot.slane %v138, 2
    %v140 = vadd.f32 %v138, %v139
    %v141 = vrot.slane %v140, 1
    %v142 = vadd.f32 %v140, %v141
    %v143 = vadd.f32 %v101, %v142
    %v144 = vmul.f32 %v130, %v130
    %v145 = vsel %vm90, %v144, 0.0
    %146 = vadd.xlane.f32.xlu0 %v145
    %v147 = vpop.xlane.xlu0 %146
    %v148 = vsel %vm90, %v147, 0.0
    %v149 = vrot.slane %v148, 4
    %v150 = vadd.f32 %v148, %v149
    %v151 = vrot.slane %v150, 2
    %v152 = vadd.f32 %v150, %v151
    %v153 = vrot.slane %v152, 1
    %v154 = vadd.f32 %v152, %v153
    %v155 = vadd.f32 %v113, %v154
    %v156 = vstv %s72
    %v157 = vmul.f32 %v143, %v156
    %v158 = vmul.f32 %v155, %v156
    %v159 = vmul.f32 %v157, %v157
    %v160 = vsub.f32 %v158, %v159
    %v161 = vmax.f32 %v160, 0.0
    %s162 = sld [smem:[#allocation8]]
    %v163 = vadd.f32 %v161, 1e-05
    %v164 = vrsqrt.pop %v163
    %v165 = vstv %s162
    %v166 = vmul.f32 %v165, %v164
    %s167 = sld [smem:[#allocation9]]
    %v168 = vmul.f32 %v157, %v166
    %v169 = vstv %s167
    %v170 = vsub.f32 %v169, %v168
    %v171 = vld [vmem:[#allocation2] sm:$0x3]
    %v172 = vmul.f32 %v171, %v166
    %v173 = vadd.f32 %v172, %v170
    %174 = vst [vmem:[%s6] sm:$0x3] %v173
    %v175 = vld [vmem:[%s131] sm:$0x3]
    %v176 = vmul.f32 %v175, %v166
    %v177 = vadd.f32 %v176, %v170
    %s178 = scalar_lea.vmem %s6, 6
    %179 = vst [vmem:[%s178] sm:$0x3] %v177
    %v180 = vld [vmem:[%s0] sm:$0x3]
    %s181 = sld [smem:[#allocation4 + $0x80]]
    %v182 = vstv %s181
    %v183 = vmul.f32 %v180, %v182
    %v184 = vld [vmem:[%s77] sm:$0x3]
    %s185 = sld [smem:[#allocation4 + $0x81]]
    %v186 = vstv %s185
    %v187 = vmul.f32 %v184, %v186
    %v188 = vadd.f32 %v183, %v187
    %v189 = vld [vmem:[%s83] sm:$0x3]
    %s190 = sld [smem:[#allocation4 + $0x82]]
    %v191 = vstv %s190
    %v192 = vmul.f32 %v189, %v191
    %v193 = vadd.f32 %v188, %v192
    %s194 = scalar_lea.vmem [#allocation2], 2
    %195 = vst [vmem:[%s194] sm:$0x3] %v193
    %v196 = vsel %vm90, %v193, 0.0
    %197 = vadd.xlane.f32.xlu0 %v196
    %v198 = vpop.xlane.xlu0 %197
    %v199 = vsel %vm90, %v198, 0.0
    %v200 = vrot.slane %v199, 4
    %v201 = vadd.f32 %v199, %v200
    %v202 = vrot.slane %v201, 2
    %v203 = vadd.f32 %v201, %v202
    %v204 = vrot.slane %v203, 1
    %v205 = vadd.f32 %v203, %v204
    %v206 = vadd.f32 %v205, 0.0
    %v207 = vmul.f32 %v193, %v193
    %v208 = vsel %vm90, %v207, 0.0
    %209 = vadd.xlane.f32.xlu0 %v208
    %v210 = vpop.xlane.xlu0 %209
    %v211 = vsel %vm90, %v210, 0.0
    %v212 = vrot.slane %v211, 4
    %v213 = vadd.f32 %v211, %v212
    %v214 = vrot.slane %v213, 2
    %v215 = vadd.f32 %v213, %v214
    %v216 = vrot.slane %v215, 1
    %v217 = vadd.f32 %v215, %v216
    %v218 = vadd.f32 %v217, 0.0
    %v219 = vld [vmem:[%s114] sm:$0x3]
    %s220 = sld [smem:[#allocation4 + $0x80]]
    %v221 = vstv %s220
    %v222 = vmul.f32 %v219, %v221
    %v223 = vld [vmem:[%s119] sm:$0x3]
    %s224 = sld [smem:[#allocation4 + $0x81]]
    %v225 = vstv %s224
    %v226 = vmul.f32 %v223, %v225
    %v227 = vadd.f32 %v222, %v226
    %v228 = vld [vmem:[%s125] sm:$0x3]
    %s229 = sld [smem:[#allocation4 + $0x82]]
    %v230 = vstv %s229
    %v231 = vmul.f32 %v228, %v230
    %v232 = vadd.f32 %v227, %v231
    %s233 = scalar_lea.vmem [#allocation2], 8
    %234 = vst [vmem:[%s233] sm:$0x3] %v232
    %v235 = vsel %vm90, %v232, 0.0
    %236 = vadd.xlane.f32.xlu0 %v235
    %v237 = vpop.xlane.xlu0 %236
    %v238 = vsel %vm90, %v237, 0.0
    %v239 = vrot.slane %v238, 4
    %v240 = vadd.f32 %v238, %v239
    %v241 = vrot.slane %v240, 2
    %v242 = vadd.f32 %v240, %v241
    %v243 = vrot.slane %v242, 1
    %v244 = vadd.f32 %v242, %v243
    %v245 = vadd.f32 %v206, %v244
    %v246 = vmul.f32 %v232, %v232
    %v247 = vsel %vm90, %v246, 0.0
    %248 = vadd.xlane.f32.xlu0 %v247
    %v249 = vpop.xlane.xlu0 %248
    %v250 = vsel %vm90, %v249, 0.0
    %v251 = vrot.slane %v250, 4
    %v252 = vadd.f32 %v250, %v251
    %v253 = vrot.slane %v252, 2
    %v254 = vadd.f32 %v252, %v253
    %v255 = vrot.slane %v254, 1
    %v256 = vadd.f32 %v254, %v255
    %v257 = vadd.f32 %v218, %v256
    %v258 = vmul.f32 %v245, %v156
    %v259 = vmul.f32 %v257, %v156
    %v260 = vmul.f32 %v258, %v258
    %v261 = vsub.f32 %v259, %v260
    %v262 = vmax.f32 %v261, 0.0
    %s263 = sld [smem:[#allocation8 + $0x1]]
    %v264 = vadd.f32 %v262, 1e-05
    %v265 = vrsqrt.pop %v264
    %v266 = vstv %s263
    %v267 = vmul.f32 %v266, %v265
    %s268 = sld [smem:[#allocation9 + $0x1]]
    %v269 = vmul.f32 %v258, %v267
    %v270 = vstv %s268
    %v271 = vsub.f32 %v270, %v269
    %v272 = vld [vmem:[%s194] sm:$0x3]
    %v273 = vmul.f32 %v272, %v267
    %v274 = vadd.f32 %v273, %v271
    %s275 = scalar_lea.vmem %s6, 2
    %276 = vst [vmem:[%s275] sm:$0x3] %v274
    %v277 = vld [vmem:[%s233] sm:$0x3]
    %v278 = vmul.f32 %v277, %v267
    %v279 = vadd.f32 %v278, %v271
    %s280 = scalar_lea.vmem %s6, 8
    %281 = vst [vmem:[%s280] sm:$0x3] %v279
    %v282 = vld [vmem:[%s0] sm:$0x3]
    %s283 = sld [smem:[#allocation4 + $0x100]]
    %v284 = vstv %s283
    %v285 = vmul.f32 %v282, %v284
    %v286 = vld [vmem:[%s77] sm:$0x3]
    %s287 = sld [smem:[#allocation4 + $0x101]]
    %v288 = vstv %s287
    %v289 = vmul.f32 %v286, %v288
    %v290 = vadd.f32 %v285, %v289
    %v291 = vld [vmem:[%s83] sm:$0x3]
    %s292 = sld [smem:[#allocation4 + $0x102]]
    %v293 = vstv %s292
    %v294 = vmul.f32 %v291, %v293
    %v295 = vadd.f32 %v290, %v294
    %s296 = scalar_lea.vmem [#allocation2], 4
    %297 = vst [vmem:[%s296] sm:$0x3] %v295
    %v298 = vsel %vm90, %v295, 0.0
    %299 = vadd.xlane.f32.xlu0 %v298
    %v300 = vpop.xlane.xlu0 %299
    %v301 = vsel %vm90, %v300, 0.0
    %v302 = vrot.slane %v301, 4
    %v303 = vadd.f32 %v301, %v302
    %v304 = vrot.slane %v303, 2
    %v305 = vadd.f32 %v303, %v304
    %v306 = vrot.slane %v305, 1
    %v307 = vadd.f32 %v305, %v306
    %v308 = vadd.f32 %v307, 0.0
    %v309 = vmul.f32 %v295, %v295
    %v310 = vsel %vm90, %v309, 0.0
    %311 = vadd.xlane.f32.xlu0 %v310
    %v312 = vpop.xlane.xlu0 %311
    %v313 = vsel %vm90, %v312, 0.0
    %v314 = vrot.slane %v313, 4
    %v315 = vadd.f32 %v313, %v314
    %v316 = vrot.slane %v315, 2
    %v317 = vadd.f32 %v315, %v316
    %v318 = vrot.slane %v317, 1
    %v319 = vadd.f32 %v317, %v318
    %v320 = vadd.f32 %v319, 0.0
    %v321 = vld [vmem:[%s114] sm:$0x3]
    %s322 = sld [smem:[#allocation4 + $0x100]]
    %v323 = vstv %s322
    %v324 = vmul.f32 %v321, %v323
    %v325 = vld [vmem:[%s119] sm:$0x3]
    %s326 = sld [smem:[#allocation4 + $0x101]]
    %v327 = vstv %s326
    %v328 = vmul.f32 %v325, %v327
    %v329 = vadd.f32 %v324, %v328
    %v330 = vld [vmem:[%s125] sm:$0x3]
    %s331 = sld [smem:[#allocation4 + $0x102]]
    %v332 = vstv %s331
    %v333 = vmul.f32 %v330, %v332
    %v334 = vadd.f32 %v329, %v333
    %s335 = scalar_lea.vmem [#allocation2], 10
    %336 = vst [vmem:[%s335] sm:$0x3] %v334
    %v337 = vsel %vm90, %v334, 0.0
    %338 = vadd.xlane.f32.xlu0 %v337
    %v339 = vpop.xlane.xlu0 %338
    %v340 = vsel %vm90, %v339, 0.0
    %v341 = vrot.slane %v340, 4
    %v342 = vadd.f32 %v340, %v341
    %v343 = vrot.slane %v342, 2
    %v344 = vadd.f32 %v342, %v343
    %v345 = vrot.slane %v344, 1
    %v346 = vadd.f32 %v344, %v345
    %v347 = vadd.f32 %v308, %v346
    %v348 = vmul.f32 %v334, %v334
    %v349 = vsel %vm90, %v348, 0.0
    %350 = vadd.xlane.f32.xlu0 %v349
    %v351 = vpop.xlane.xlu0 %350
    %v352 = vsel %vm90, %v351, 0.0
    %v353 = vrot.slane %v352, 4
    %v354 = vadd.f32 %v352, %v353
    %v355 = vrot.slane %v354, 2
    %v356 = vadd.f32 %v354, %v355
    %v357 = vrot.slane %v356, 1
    %v358 = vadd.f32 %v356, %v357
    %v359 = vadd.f32 %v320, %v358
    %v360 = vmul.f32 %v347, %v156
    %v361 = vmul.f32 %v359, %v156
    %v362 = vmul.f32 %v360, %v360
    %v363 = vsub.f32 %v361, %v362
    %v364 = vmax.f32 %v363, 0.0
    %s365 = sld [smem:[#allocation8 + $0x2]]
    %v366 = vadd.f32 %v364, 1e-05
    %v367 = vrsqrt.pop %v366
    %v368 = vstv %s365
    %v369 = vmul.f32 %v368, %v367
    %s370 = sld [smem:[#allocation9 + $0x2]]
    %v371 = vmul.f32 %v360, %v369
    %v372 = vstv %s370
    %v373 = vsub.f32 %v372, %v371
    %v374 = vld [vmem:[%s296] sm:$0x3]
    %v375 = vmul.f32 %v374, %v369
    %v376 = vadd.f32 %v375, %v373
    %s377 = scalar_lea.vmem %s6, 4
    %378 = vst [vmem:[%s377] sm:$0x3] %v376
    %v379 = vld [vmem:[%s335] sm:$0x3]
    %v380 = vmul.f32 %v379, %v369
    %v381 = vadd.f32 %v380, %v373
    %s382 = scalar_lea.vmem %s6, 10
    %383 = vst [vmem:[%s382] sm:$0x3] %v381
    // Predicated region
    $region42: #{conv1x1_bn.1} parent=1 // pred_check
      _
    $region43: #{conv1x1_bn.1} parent=1 // pred_check_branch
      %385 = sbr.rel (0) target = $region45
    $region44: #{conv1x1_bn.1} parent=1 // pred_region
      _
    $region45: #{conv1x1_bn.1} parent=1 // pred_fallthru
      _
    // Predicated region
    $region46: #{conv1x1_bn.1} parent=1 // pred_check
      _
    $region47: #{conv1x1_bn.1} parent=1 // pred_check_branch
      %387 = sbr.rel (0) target = $region49
    $region48: #{conv1x1_bn.1} parent=1 // pred_region
      _
    $region49: #{conv1x1_bn.1} parent=1 // pred_fallthru
      _
    %388 = vsyncpa [#allocation5], 1
    %389 = vsyncpa [#allocation7], 1
    %390 = vsyncpa [#allocation10], 1

</llo_original>
